<compile_context>
chip_gen: v7x
topology: tpu7x:2x2x1
jax: 0.10.0
libtpu: 0.0.40
codegen_flags: <defaults>
</compile_context>

<pallas_src>
import math

import jax
import jax.numpy as jnp
import numpy as np
from jax.experimental import pallas as pl
from jax.experimental.pallas import tpu as pltpu

_LANE = 128     # lane tile (last dim)
_SUBLANE = 8    # f32 sublane tile (second-to-last dim)


def _build_selectors(D, H, W, n_pad, tn):
    """Host-side (trace-time) segmented-cumsum selector matrices.

    Returns (n_col_tiles, n_pad, 3*tn) bf16; slab [j] is
    [sel_w | sel_h | sel_d] restricted to output columns j*tn:(j+1)*tn so the
    kernel does a single fused MXU matmul per column tile.
    Entries are exactly 0/1, so bf16 is lossless.
    """
    N = D * H * W
    idx = np.arange(N)
    d = idx // (H * W)
    h = (idx // W) % H
    w = idx % W
    le = idx[:, None] <= idx[None, :]                 # source k <= target j
    same_d = d[:, None] == d[None, :]
    same_h = h[:, None] == h[None, :]
    same_w = w[:, None] == w[None, :]
    sel_w = le & same_d & same_h                      # cumsum over W (axis 4)
    sel_h = le & same_d & same_w                      # cumsum over H (axis 3)
    sel_d = le & same_h & same_w                      # cumsum over D (axis 2)

    def pad(s):
        out = np.zeros((n_pad, n_pad), np.float32)
        out[:N, :N] = s
        return out

    sel_w, sel_h, sel_d = pad(sel_w), pad(sel_h), pad(sel_d)
    n_col = n_pad // tn
    tiles = np.stack(
        [np.concatenate([sel_w[:, j * tn:(j + 1) * tn],
                         sel_h[:, j * tn:(j + 1) * tn],
                         sel_d[:, j * tn:(j + 1) * tn]], axis=1)
         for j in range(n_col)], axis=0)
    return jnp.asarray(tiles, dtype=jnp.bfloat16)     # (n_col, n_pad, 3*tn)


def _make_kernel(tn):
    inv_pi = 1.0 / math.pi

    def kernel(mask_ref, sel_ref, out_ref):
        j = pl.program_id(1)
        m_all = mask_ref[...]                                    # (tm, n_pad) bf16
        sel = sel_ref[0]                                         # (n_pad, 3*tn) bf16
        # One fused MXU matmul: all three segmented cumsums for this column tile.
        cs = jnp.dot(m_all, sel, preferred_element_type=jnp.float32)  # (tm, 3*tn)
        cs_w = cs[:, 0 * tn:1 * tn]
        cs_h = cs[:, 1 * tn:2 * tn]
        cs_d = cs[:, 2 * tn:3 * tn]
        # Mask values at the target (output) columns of this tile.
        start = pl.multiple_of(j * tn, _LANE)
        m = mask_ref[:, pl.ds(start, tn)].astype(jnp.float32)    # (tm, tn)
        x_term = jnp.sin(cs_w * m * inv_pi)
        y_term = jnp.sin(cs_h * m)        # sin(pi * (cs_h*m/pi)) == sin(cs_h*m)
        z_term = cs_d * m * inv_pi
        out_ref[...] = (m * (x_term + y_term + z_term)).astype(out_ref.dtype)

    return kernel


def position_embedding_sine(x, mask):
    """Forward of PositionEmbeddingSine. `x` is unused by the reference module.

    `mask` is assumed binary (0/1), as produced by the Swin caller.
    """
    assert mask is not None
    del x
    B, C, D, H, W = mask.shape
    N = D * H * W
    rows = B * C

    n_pad = -(-N // _LANE) * _LANE               # pad lanes to a multiple of 128
    rows_pad = -(-rows // _SUBLANE) * _SUBLANE   # pad rows to a multiple of 8
    tn = _LANE                                   # 128-wide column tiles
    if rows_pad <= 128:
        tm = rows_pad
    elif rows_pad % 128 == 0:
        tm = 128
    else:
        tm = _SUBLANE
    n_row, n_col = rows_pad // tm, n_pad // tn

    # Binary mask -> bf16 is lossless; halves the HBM->VMEM DMA.
    mask2d = mask.reshape(rows, N).astype(jnp.bfloat16)
    mask2d = jnp.pad(mask2d, ((0, rows_pad - rows), (0, n_pad - N)))

    sel = _build_selectors(D, H, W, n_pad, tn)   # host constant, bf16

    cost = pl.CostEstimate(
        flops=2 * rows_pad * n_pad * 3 * n_pad,
        transcendentals=2 * rows_pad * n_pad,
        bytes_accessed=(mask2d.size * 2 + sel.size * 2 + rows_pad * n_pad * 4),
    )

    out = pl.pallas_call(
        _make_kernel(tn),
        out_shape=jax.ShapeDtypeStruct((rows_pad, n_pad), jnp.float32),
        grid=(n_row, n_col),
        in_specs=[
            # Mask row block: resident across all column tiles (one DMA per row tile).
            pl.BlockSpec((tm, n_pad), lambda i, j: (i, 0)),
            # Fused selector slab for this column tile (host constant, bf16).
            pl.BlockSpec((1, n_pad, 3 * tn), lambda i, j: (j, 0, 0)),
        ],
        out_specs=pl.BlockSpec((tm, tn), lambda i, j: (i, j)),
        compiler_params=pltpu.CompilerParams(
            dimension_semantics=("parallel", "parallel")),
        cost_estimate=cost,
    )(mask2d, sel)

    embed = out[:rows, :N].reshape(B, C, N)
    # torch.diagonal(embed, dim1=1, dim2=2) -> cheap host-side glue.
    diag = jnp.diagonal(embed, axis1=1, axis2=2)
    return embed, diag


def _reference(mask):
    m = mask.astype(jnp.float32)
    z = jnp.cumsum(m, axis=2) * m / math.pi
    y = jnp.cumsum(m, axis=3) * m / math.pi
    x = jnp.cumsum(m, axis=4) * m / math.pi
    e = m * (jnp.sin(x) + jnp.sin(math.pi * y) + z)
    e = e.reshape(e.shape[0], e.shape[1], -1)
    return e, jnp.diagonal(e, axis1=1, axis2=2)


if __name__ == "__main__":
    key = jax.random.PRNGKey(0)
    kx, km = jax.random.split(key)
    B, C, D, H, W = 2, 4, 4, 8, 8
    x = jax.random.normal(kx, (B, C, D, H, W), jnp.float32)
    mask = (jax.random.uniform(km, (B, C, D, H, W)) > 0.3).astype(jnp.float32)

    embed, diag = position_embedding_sine(x, mask)
    jax.block_until_ready((embed, diag))

    ref_embed, ref_diag = _reference(mask)
    np.testing.assert_allclose(np.asarray(embed), np.asarray(ref_embed),
                               rtol=1e-5, atol=1e-5)
    np.testing.assert_allclose(np.asarray(diag), np.asarray(ref_diag),
                               rtol=1e-5, atol=1e-5)
    print("KERNEL_OK")
</pallas_src>

<mosaic_0001>
module attributes {stable_mosaic.version = 11 : i64} {
  func.func @kernel(%arg0: i32, %arg1: i32, %arg2: memref<8x256xbf16, #tpu.memory_space<vmem>>, %arg3: memref<1x256x384xbf16, #tpu.memory_space<vmem>>, %arg4: memref<8x128xf32, #tpu.memory_space<vmem>>) attributes {dimension_semantics = [#tpu.dimension_semantics<parallel>, #tpu.dimension_semantics<parallel>], iteration_bounds = array<i64: 1, 2>, scalar_prefetch = 0 : i64, scratch_operands = 0 : i64, tpu.core_type = #tpu.core_type<tc>, window_params = [{transform_indices = @transform_0, window_bounds = array<i64: 8, 256>}, {transform_indices = @transform_1, window_bounds = array<i64: 1, 256, 384>}, {transform_indices = @transform_2, window_bounds = array<i64: 8, 128>}]} {
    %c0 = arith.constant 0 : index
    %c0_0 = arith.constant 0 : index
    %0 = vector.load %arg2[%c0, %c0_0] : memref<8x256xbf16, #tpu.memory_space<vmem>>, vector<8x256xbf16>
    %c0_1 = arith.constant 0 : index
    %c0_2 = arith.constant 0 : index
    %c0_3 = arith.constant 0 : index
    %1 = vector.load %arg3[%c0_1, %c0_2, %c0_3] : memref<1x256x384xbf16, #tpu.memory_space<vmem>>, vector<1x256x384xbf16>
    %2 = vector.shape_cast %1 : vector<1x256x384xbf16> to vector<256x384xbf16>
    %cst = arith.constant dense<0.000000e+00> : vector<8x384xf32>
    %3 = tpu.matmul %0, %2, %cst {dimension_numbers = #tpu.dot_dimension_numbers<[1], [0], [0], [1], [0, 0, 1, 1], [], []>} : vector<8x256xbf16>, vector<256x384xbf16>, vector<8x384xf32> -> vector<8x384xf32>
    %4 = vector.extract_strided_slice %3 {offsets = [0, 0], sizes = [8, 128], strides = [1, 1]} : vector<8x384xf32> to vector<8x128xf32>
    %5 = vector.extract_strided_slice %3 {offsets = [0, 128], sizes = [8, 128], strides = [1, 1]} : vector<8x384xf32> to vector<8x128xf32>
    %6 = vector.extract_strided_slice %3 {offsets = [0, 256], sizes = [8, 128], strides = [1, 1]} : vector<8x384xf32> to vector<8x128xf32>
    %c128_i32 = arith.constant 128 : i32
    %7 = arith.muli %arg1, %c128_i32 : i32
    %8 = tpu.assume_multiple %7, 128 : i32
    %c0_4 = arith.constant 0 : index
    %9 = arith.index_cast %8 : i32 to index
    %10 = vector.load %arg2[%c0_4, %9] : memref<8x256xbf16, #tpu.memory_space<vmem>>, vector<8x128xbf16>
    %11 = arith.extf %10 : vector<8x128xbf16> to vector<8x128xf32>
    %12 = arith.mulf %4, %11 : vector<8x128xf32>
    %cst_5 = arith.constant 0.318309873 : f32
    %13 = vector.broadcast %cst_5 : f32 to vector<8x128xf32>
    %14 = arith.mulf %12, %13 : vector<8x128xf32>
    %15 = math.sin %14 : vector<8x128xf32>
    %16 = arith.mulf %5, %11 : vector<8x128xf32>
    %17 = math.sin %16 : vector<8x128xf32>
    %18 = arith.mulf %6, %11 : vector<8x128xf32>
    %cst_6 = arith.constant 0.318309873 : f32
    %19 = vector.broadcast %cst_6 : f32 to vector<8x128xf32>
    %20 = arith.mulf %18, %19 : vector<8x128xf32>
    %21 = arith.addf %15, %17 : vector<8x128xf32>
    %22 = arith.addf %21, %20 : vector<8x128xf32>
    %23 = arith.mulf %11, %22 : vector<8x128xf32>
    %c0_7 = arith.constant 0 : index
    %c0_8 = arith.constant 0 : index
    %24 = vector.load %arg4[%c0_7, %c0_8] : memref<8x128xf32, #tpu.memory_space<vmem>>, vector<8x128xf32>
    tpu.vector_store %arg4[%c0_7, %c0_8], %23 {strides = array<i32>} : memref<8x128xf32, #tpu.memory_space<vmem>>, vector<8x128xf32>,
    return
  }
  func.func @transform_0(%arg0: i32, %arg1: i32) -> (i32, i32) {
    %c0_i32 = arith.constant 0 : i32
    %c0_i32_0 = arith.constant 0 : i32
    return %arg0, %c0_i32 : i32, i32
  }
  func.func @transform_1(%arg0: i32, %arg1: i32) -> (i32, i32, i32) {
    %c0_i32 = arith.constant 0 : i32
    %c0_i32_0 = arith.constant 0 : i32
    %c0_i32_1 = arith.constant 0 : i32
    return %arg1, %c0_i32, %c0_i32_0 : i32, i32, i32
  }
  func.func @transform_2(%arg0: i32, %arg1: i32) -> (i32, i32) {
    %c0_i32 = arith.constant 0 : i32
    return %arg0, %arg1 : i32, i32
  }
}

</mosaic_0001>

<llo_original>
// kernel: tpu_custom_call.1
$region0: #{tpu_custom_call.1}
  #allocation0 [shape = 'u32[]', space=smem, size = 0x4, offset = 0x4, fixed_abs, tag = 'smem constant byte address 0x4 - core index']
  #allocation1 [shape = 'u32[144,128]{1,0:T(1,128)}', space=vmem, size = 0x12000, scoped, tag = 'internal scratch']
  %s0 = inlined_call_operand.hbm [shape: bf16[8,256], index: 0, kind: input, shape index: {}]
  %s1 = inlined_call_operand.hbm [shape: bf16[2,256,384], index: 1, kind: input, shape index: {}]
  %s2 = inlined_call_operand.hbm [shape: f32[8,256], index: 2, kind: output, shape index: {}]
  %s3 = sld [smem:[#allocation0]]
  $region49: #{tpu_custom_call.1} parent=0
    _
  %s5 = ssub.s32 1, %s3
  %s6 = scalar_select 0, %s5, %s3
  $region1: #{tpu_custom_call.1} parent=0
    #allocation2 [shape = 'u8[4096]{0}', space=vmem, size = 0x1000, scoped, tag = 'input window, operand 0, single buffered']
    #allocation3 [shape = 's32[2]{0}', space=sflag, size = 0x8, scoped, tag = 'scoped memory for tpu_custom_call.1']
    #allocation4 [shape = 's32[2]{0}', space=sflag, size = 0x8, scoped, tag = 'scoped memory for tpu_custom_call.1']
    #allocation5 [shape = 'u8[393216]{0}', space=vmem, size = 0x60000, scoped, tag = 'input window, operand 1']
    #allocation6 [shape = 's32[2]{0}', space=sflag, size = 0x8, scoped, tag = 'scoped memory for tpu_custom_call.1']
    #allocation7 [shape = 'u8[8192]{0}', space=vmem, size = 0x2000, scoped, tag = 'output window, operand 0']
    %7 = vsyncpa [#allocation3], 0
    %8 = vsyncpa [#allocation6], 0
    %s9 = scalar_lea.sflag [#allocation6], 1
    %10 = vsyncpa %s9, 0
    %11 = vsyncpa [#allocation4], 0
    %s12 = scalar_lea.sflag [#allocation4], 1
    %13 = vsyncpa %s12, 0
    loop: start=0, step=1, limit=4
    $region2: #{tpu_custom_call.1} parent=1 // loop_pre_header
      _
    $region3: #{tpu_custom_call.1} parent=1 // loop_header
      %s15 = sphi 0, %s19
      %p16 = scmp.ge.s32.totalorder %s15, 4
      %s22 = sphi 0, %s34
      %s23 = sphi 0, %s30
      %s24 = sphi 0, %s22
      %s25 = sphi 0, %s23
      %s26 = sphi 0, %s24
      %s27 = sphi 0, %s25
      %s37 = sphi 0, %s39
      %s40 = sphi 0, %s37
      %s41 = sphi 0, %s40
      %s57 = sphi 0, %s41
      %s63 = sphi 0, %s65
      %s66 = sphi 0, %s63
      %s67 = sphi 0, %s66
      %s83 = sphi 0, %s67
      %s91 = sphi 0, %s93
      %s94 = sphi 0, %s91
      %s95 = sphi 0, %s94
      %s111 = sphi 0, %s95
    $region4: #{tpu_custom_call.1} parent=1 // loop_header_branch
      %18 = sbr.rel (%p16) target = $region8
    $region5: #{tpu_custom_call.1} parent=1 // loop_body
      %s20 = ssub.s32 %s15, 1
      %s21 = ssub.s32 %s15, 2
      %s28 = sadd.s32 1, %s23
      %p29 = scmp.ge.s32.totalorder %s28, 2
      %s30 = scalar_select %p29, 0, %s28
      %s31 = sadd.s32 1, %s22
      %s32 = scalar_select %p29, %s31, %s22
      %p33 = scmp.ge.s32.totalorder %s32, 1
      %s34 = scalar_select %p33, 0, %s32
      %s35 = ssub.s32 %s22, %s34
      %p36 = scmp.eq.s32.totalorder %s35, 0
      %s38 = sadd.s32 %s37, 1
      %s39 = scalar_select %p36, %s37, %s38
      %p42 = pneg %p36
      %p43 = scmp.eq.s32.totalorder %s15, 1
      %p44 = por %p42, %p43
      %p45 = scmp.ne.s32.totalorder %s37, %s40
      %p46 = scmp.eq.s32.totalorder %s15, 0
      %p47 = por %p45, %p46
      %p48 = scmp.ne.s32.totalorder %s37, %s40
      %p49 = scmp.eq.s32.totalorder %s20, 1
      %p50 = por %p48, %p49
      %p51 = scmp.ne.s32.totalorder %s40, %s41
      %p52 = scmp.eq.s32.totalorder %s20, 0
      %p53 = por %p51, %p52
      %p54 = scmp.ne.s32.totalorder %s40, %s41
      %p55 = scmp.eq.s32.totalorder %s21, 1
      %p56 = por %p54, %p55
      %p58 = scmp.ne.s32.totalorder %s41, %s57
      %p59 = scmp.eq.s32.totalorder %s21, 0
      %p60 = por %p58, %p59
      %s61 = ssub.s32 %s23, %s30
      %p62 = scmp.eq.s32.totalorder %s61, 0
      %s64 = sadd.s32 %s63, 1
      %s65 = scalar_select %p62, %s63, %s64
      %p68 = pneg %p62
      %p69 = scmp.eq.s32.totalorder %s15, 1
      %p70 = por %p68, %p69
      %p71 = scmp.ne.s32.totalorder %s63, %s66
      %p72 = scmp.eq.s32.totalorder %s15, 0
      %p73 = por %p71, %p72
      %p74 = scmp.ne.s32.totalorder %s63, %s66
      %p75 = scmp.eq.s32.totalorder %s20, 1
      %p76 = por %p74, %p75
      %p77 = scmp.ne.s32.totalorder %s66, %s67
      %p78 = scmp.eq.s32.totalorder %s20, 0
      %p79 = por %p77, %p78
      %p80 = scmp.ne.s32.totalorder %s66, %s67
      %p81 = scmp.eq.s32.totalorder %s21, 1
      %p82 = por %p80, %p81
      %p84 = scmp.ne.s32.totalorder %s67, %s83
      %p85 = scmp.eq.s32.totalorder %s21, 0
      %p86 = por %p84, %p85
      %s87 = ssub.s32 %s22, %s34
      %s88 = ssub.s32 %s23, %s30
      %s89 = sor.u32 %s87, %s88
      %p90 = scmp.eq.s32.totalorder %s89, 0
      %s92 = sadd.s32 %s91, 1
      %s93 = scalar_select %p90, %s91, %s92
      %p96 = pneg %p90
      %p97 = scmp.eq.s32.totalorder %s15, 1
      %p98 = por %p96, %p97
      %p99 = scmp.ne.s32.totalorder %s91, %s94
      %p100 = scmp.eq.s32.totalorder %s15, 0
      %p101 = por %p99, %p100
      %p102 = scmp.ne.s32.totalorder %s91, %s94
      %p103 = scmp.eq.s32.totalorder %s20, 1
      %p104 = por %p102, %p103
      %p105 = scmp.ne.s32.totalorder %s94, %s95
      %p106 = scmp.eq.s32.totalorder %s20, 0
      %p107 = por %p105, %p106
      %p108 = scmp.ne.s32.totalorder %s94, %s95
      %p109 = scmp.eq.s32.totalorder %s21, 1
      %p110 = por %p108, %p109
      %p112 = scmp.ne.s32.totalorder %s95, %s111
      %p113 = scmp.eq.s32.totalorder %s21, 0
      %p114 = por %p112, %p113
      %p115 = scmp.le.s32.totalorder 1, %s15
      %p116 = scmp.lt.s32.totalorder %s15, 3
      %p117 = pnand %p115, %p116
      %p118 = pneg %p117
      // Predicated region
      $region9: #{tpu_custom_call.1} parent=5 // pred_check
        _
      $region10: #{tpu_custom_call.1} parent=5 // pred_check_branch
        %120 = sbr.rel (%p117) target = $region12
      $region11: #{tpu_custom_call.1} parent=5 // pred_region
        %s121 = ssub.s32 %s15, 1
        // Predicated region
        $region13: #{tpu_custom_call.1} parent=11 // pred_check
          %p122 = pneg %p53
        $region14: #{tpu_custom_call.1} parent=11 // pred_check_branch
          %124 = sbr.rel (%p122) target = $region16
        $region15: #{tpu_custom_call.1} parent=11 // pred_region
          %s126 = ssub.s32 128, 128
          %127 = vsyncadd [#allocation3], %s126
          %s128 = smul.addr %s24, 2
          %s129 = smul.addr %s128, 64
          %s130 = scalar_lea.hbm %s0, %s129
          %s132 = sshll.u32 [#allocation2], 4
          %s133 = int_to_ptr.vmem [resolvable:$true] %s132
          %135 = dma.hbm_to_vmem [thread:$0]  %s130, 128, %s133, [#allocation3]
        $region16: #{tpu_custom_call.1} parent=11 // pred_fallthru
          _
      $region12: #{tpu_custom_call.1} parent=5 // pred_fallthru
        _
      %p136 = scmp.lt.s32.totalorder %s15, 2
      // Predicated region
      $region17: #{tpu_custom_call.1} parent=5 // pred_check
        %p137 = pneg %p136
      $region18: #{tpu_custom_call.1} parent=5 // pred_check_branch
        %139 = sbr.rel (%p137) target = $region20
      $region19: #{tpu_custom_call.1} parent=5 // pred_region
        // Predicated region
        $region21: #{tpu_custom_call.1} parent=19 // pred_check
          %p140 = pneg %p73
        $region22: #{tpu_custom_call.1} parent=19 // pred_check_branch
          %142 = sbr.rel (%p140) target = $region24
        $region23: #{tpu_custom_call.1} parent=19 // pred_region
          %s143 = sand.u32 %s63, 1
          %s144 = scalar_lea.sflag [#allocation6], %s143
          %s145 = sand.u32 %s63, 1
          %s146 = smul.addr %s145, 384
          %s147 = scalar_lea.vmem [#allocation5], %s146
          %s149 = ssub.s32 6144, 6144
          %150 = vsyncadd %s144, %s149
          %s151 = smul.addr %s23, 96
          %s152 = smul.addr %s151, 64
          %s153 = scalar_lea.hbm %s1, %s152
          %s154 = sshll.u32 %s147, 4
          %s155 = int_to_ptr.vmem [resolvable:$true] %s154
          %160 = dma.hbm_to_vmem [thread:$0]  %s153, 6144, %s155, %s144, 192, 192, 12
        $region24: #{tpu_custom_call.1} parent=19 // pred_fallthru
          _
      $region20: #{tpu_custom_call.1} parent=5 // pred_fallthru
        _
      %p161 = scmp.le.s32.totalorder 1, %s15
      %p162 = scmp.lt.s32.totalorder %s15, 3
      %p163 = pnand %p161, %p162
      %p164 = pneg %p163
      // Predicated region
      $region25: #{tpu_custom_call.1} parent=5 // pred_check
        _
      $region26: #{tpu_custom_call.1} parent=5 // pred_check_branch
        %166 = sbr.rel (%p163) target = $region28
      $region27: #{tpu_custom_call.1} parent=5 // pred_region
        %s167 = ssub.s32 %s15, 1
        // Predicated region
        $region29: #{tpu_custom_call.1} parent=27 // pred_check
          %p168 = pneg %p53
        $region30: #{tpu_custom_call.1} parent=27 // pred_check_branch
          %170 = sbr.rel (%p168) target = $region32
        $region31: #{tpu_custom_call.1} parent=27 // pred_region
          %171 = dma.done [#allocation3], 128
        $region32: #{tpu_custom_call.1} parent=27 // pred_fallthru
          _
        %s172 = sand.u32 %s66, 1
        %s173 = scalar_lea.sflag [#allocation6], %s172
        %s174 = sand.u32 %s66, 1
        %s175 = smul.addr %s174, 384
        %s176 = scalar_lea.vmem [#allocation5], %s175
        // Predicated region
        $region33: #{tpu_custom_call.1} parent=27 // pred_check
          %p177 = pneg %p79
        $region34: #{tpu_custom_call.1} parent=27 // pred_check_branch
          %179 = sbr.rel (%p177) target = $region36
        $region35: #{tpu_custom_call.1} parent=27 // pred_region
          %180 = dma.done %s173, 6144
        $region36: #{tpu_custom_call.1} parent=27 // pred_fallthru
          _
        %p181 = pneg %p53
        %p182 = pneg %p50
        %s183 = sand.u32 %s66, 1
        %s184 = scalar_lea.sflag [#allocation6], %s183
        %s185 = sand.u32 %s66, 1
        %s186 = smul.addr %s185, 384
        %s187 = scalar_lea.vmem [#allocation5], %s186
        %p188 = pneg %p79
        %p189 = pneg %p76
        %p190 = pneg %p107
        %p191 = pneg %p104
        %s192 = sand.u32 %s94, 1
        %s193 = scalar_lea.sflag [#allocation4], %s192
        %s194 = sand.u32 %s94, 1
        %s195 = smul.addr %s194, 8
        %s196 = scalar_lea.vmem [#allocation7], %s195
        %v198 = vld [vmem:[#allocation2] sm:$0xff]
        %v199 = vld [vmem:[%s176] sm:$0xff]
        %v200 = vld [vmem:[%s176 + $0x8] sm:$0xf]
        %v201 = vld [vmem:[%s176 + $0xc] sm:$0xff]
        %v202 = vld [vmem:[%s176 + $0x14] sm:$0xf]
        %v203 = vld [vmem:[%s176 + $0x18] sm:$0xff]
        %v204 = vld [vmem:[%s176 + $0x20] sm:$0xf]
        %v205 = vld [vmem:[%s176 + $0x24] sm:$0xff]
        %v206 = vld [vmem:[%s176 + $0x2c] sm:$0xf]
        %v207 = vld [vmem:[%s176 + $0x30] sm:$0xff]
        %v208 = vld [vmem:[%s176 + $0x38] sm:$0xf]
        %v209 = vld [vmem:[%s176 + $0x3c] sm:$0xff]
        %v210 = vld [vmem:[%s176 + $0x44] sm:$0xf]
        %v211 = vld [vmem:[%s176 + $0x48] sm:$0xff]
        %v212 = vld [vmem:[%s176 + $0x50] sm:$0xf]
        %v213 = vld [vmem:[%s176 + $0x54] sm:$0xff]
        %v214 = vld [vmem:[%s176 + $0x5c] sm:$0xf]
        %v215 = vld [vmem:[%s176 + $0x60] sm:$0xff]
        %v216 = vld [vmem:[%s176 + $0x68] sm:$0xf]
        %v217 = vld [vmem:[%s176 + $0x6c] sm:$0xff]
        %v218 = vld [vmem:[%s176 + $0x74] sm:$0xf]
        %v219 = vld [vmem:[%s176 + $0x78] sm:$0xff]
        %v220 = vld [vmem:[%s176 + $0x80] sm:$0xf]
        %v221 = vld [vmem:[%s176 + $0x84] sm:$0xff]
        %v222 = vld [vmem:[%s176 + $0x8c] sm:$0xf]
        %v223 = vld [vmem:[%s176 + $0x90] sm:$0xff]
        %v224 = vld [vmem:[%s176 + $0x98] sm:$0xf]
        %v225 = vld [vmem:[%s176 + $0x9c] sm:$0xff]
        %v226 = vld [vmem:[%s176 + $0xa4] sm:$0xf]
        %v227 = vld [vmem:[%s176 + $0xa8] sm:$0xff]
        %v228 = vld [vmem:[%s176 + $0xb0] sm:$0xf]
        %v229 = vld [vmem:[%s176 + $0xb4] sm:$0xff]
        %v230 = vld [vmem:[%s176 + $0xbc] sm:$0xf]
        %v231 = vld [vmem:[%s176 + $0xc0] sm:$0xff]
        %v232 = vld [vmem:[%s176 + $0xc8] sm:$0xf]
        %v233 = vld [vmem:[%s176 + $0xcc] sm:$0xff]
        %v234 = vld [vmem:[%s176 + $0xd4] sm:$0xf]
        %v235 = vld [vmem:[%s176 + $0xd8] sm:$0xff]
        %v236 = vld [vmem:[%s176 + $0xe0] sm:$0xf]
        %v237 = vld [vmem:[%s176 + $0xe4] sm:$0xff]
        %v238 = vld [vmem:[%s176 + $0xec] sm:$0xf]
        %v239 = vld [vmem:[%s176 + $0xf0] sm:$0xff]
        %v240 = vld [vmem:[%s176 + $0xf8] sm:$0xf]
        %v241 = vld [vmem:[%s176 + $0xfc] sm:$0xff]
        %v242 = vld [vmem:[%s176 + $0x104] sm:$0xf]
        %v243 = vld [vmem:[%s176 + $0x108] sm:$0xff]
        %v244 = vld [vmem:[%s176 + $0x110] sm:$0xf]
        %v245 = vld [vmem:[%s176 + $0x114] sm:$0xff]
        %v246 = vld [vmem:[%s176 + $0x11c] sm:$0xf]
        %v247 = vld [vmem:[%s176 + $0x120] sm:$0xff]
        %v248 = vld [vmem:[%s176 + $0x128] sm:$0xf]
        %v249 = vld [vmem:[%s176 + $0x12c] sm:$0xff]
        %v250 = vld [vmem:[%s176 + $0x134] sm:$0xf]
        %v251 = vld [vmem:[%s176 + $0x138] sm:$0xff]
        %v252 = vld [vmem:[%s176 + $0x140] sm:$0xf]
        %v253 = vld [vmem:[%s176 + $0x144] sm:$0xff]
        %v254 = vld [vmem:[%s176 + $0x14c] sm:$0xf]
        %v255 = vld [vmem:[%s176 + $0x150] sm:$0xff]
        %v256 = vld [vmem:[%s176 + $0x158] sm:$0xf]
        %v257 = vld [vmem:[%s176 + $0x15c] sm:$0xff]
        %v258 = vld [vmem:[%s176 + $0x164] sm:$0xf]
        %v259 = vld [vmem:[%s176 + $0x168] sm:$0xff]
        %v260 = vld [vmem:[%s176 + $0x170] sm:$0xf]
        %v261 = vld [vmem:[%s176 + $0x174] sm:$0xff]
        %v262 = vld [vmem:[%s176 + $0x17c] sm:$0xf]
        %v264 = vunpack.c.l.b16 %v198
        %v265 = vunpack.c.h.b16 %v198
        %v266 = vpack.c.b16 %v264, %v264
        %v267 = vpack.c.b16 %v265, %v265
        %v334 = vunpack.c.l.b16 %v199
        %v335 = vunpack.c.h.b16 %v199
        %v336 = vunpack.c.l.b16 %v200
        %v337 = vunpack.c.l.b16 %v201
        %v338 = vunpack.c.h.b16 %v201
        %v339 = vunpack.c.l.b16 %v202
        %v340 = vunpack.c.l.b16 %v203
        %v341 = vunpack.c.h.b16 %v203
        %v342 = vunpack.c.l.b16 %v204
        %v343 = vunpack.c.l.b16 %v205
        %v344 = vunpack.c.h.b16 %v205
        %v345 = vunpack.c.l.b16 %v206
        %v346 = vunpack.c.l.b16 %v207
        %v347 = vunpack.c.h.b16 %v207
        %v348 = vunpack.c.l.b16 %v208
        %v349 = vunpack.c.l.b16 %v209
        %v350 = vunpack.c.h.b16 %v209
        %v351 = vunpack.c.l.b16 %v210
        %v352 = vunpack.c.l.b16 %v211
        %v353 = vunpack.c.h.b16 %v211
        %v354 = vunpack.c.l.b16 %v212
        %v355 = vunpack.c.l.b16 %v213
        %v356 = vunpack.c.h.b16 %v213
        %v357 = vunpack.c.l.b16 %v214
        %v358 = vunpack.c.l.b16 %v215
        %v359 = vunpack.c.h.b16 %v215
        %v360 = vunpack.c.l.b16 %v216
        %v361 = vunpack.c.l.b16 %v217
        %v362 = vunpack.c.h.b16 %v217
        %v363 = vunpack.c.l.b16 %v218
        %v364 = vunpack.c.l.b16 %v219
        %v365 = vunpack.c.h.b16 %v219
        %v366 = vunpack.c.l.b16 %v220
        %v367 = vunpack.c.l.b16 %v221
        %v368 = vunpack.c.h.b16 %v221
        %v369 = vunpack.c.l.b16 %v222
        %v370 = vunpack.c.l.b16 %v223
        %v371 = vunpack.c.h.b16 %v223
        %v372 = vunpack.c.l.b16 %v224
        %v373 = vunpack.c.l.b16 %v225
        %v374 = vunpack.c.h.b16 %v225
        %v375 = vunpack.c.l.b16 %v226
        %v376 = vunpack.c.l.b16 %v227
        %v377 = vunpack.c.h.b16 %v227
        %v378 = vunpack.c.l.b16 %v228
        %v379 = vunpack.c.l.b16 %v229
        %v380 = vunpack.c.h.b16 %v229
        %v381 = vunpack.c.l.b16 %v230
        %v382 = vunpack.c.l.b16 %v231
        %v383 = vunpack.c.h.b16 %v231
        %v384 = vunpack.c.l.b16 %v232
        %v385 = vunpack.c.l.b16 %v233
        %v386 = vunpack.c.h.b16 %v233
        %v387 = vunpack.c.l.b16 %v234
        %v388 = vunpack.c.l.b16 %v235
        %v389 = vunpack.c.h.b16 %v235
        %v390 = vunpack.c.l.b16 %v236
        %v391 = vunpack.c.l.b16 %v237
        %v392 = vunpack.c.h.b16 %v237
        %v393 = vunpack.c.l.b16 %v238
        %v394 = vunpack.c.l.b16 %v239
        %v395 = vunpack.c.h.b16 %v239
        %v396 = vunpack.c.l.b16 %v240
        %v397 = vunpack.c.l.b16 %v241
        %v398 = vunpack.c.h.b16 %v241
        %v399 = vunpack.c.l.b16 %v242
        %v400 = vunpack.c.l.b16 %v243
        %v401 = vunpack.c.h.b16 %v243
        %v402 = vunpack.c.l.b16 %v244
        %v403 = vunpack.c.l.b16 %v245
        %v404 = vunpack.c.h.b16 %v245
        %v405 = vunpack.c.l.b16 %v246
        %v406 = vunpack.c.l.b16 %v247
        %v407 = vunpack.c.h.b16 %v247
        %v408 = vunpack.c.l.b16 %v248
        %v409 = vunpack.c.l.b16 %v249
        %v410 = vunpack.c.h.b16 %v249
        %v411 = vunpack.c.l.b16 %v250
        %v412 = vunpack.c.l.b16 %v251
        %v413 = vunpack.c.h.b16 %v251
        %v414 = vunpack.c.l.b16 %v252
        %v415 = vunpack.c.l.b16 %v253
        %v416 = vunpack.c.h.b16 %v253
        %v417 = vunpack.c.l.b16 %v254
        %v418 = vunpack.c.l.b16 %v255
        %v419 = vunpack.c.h.b16 %v255
        %v420 = vunpack.c.l.b16 %v256
        %v421 = vunpack.c.l.b16 %v257
        %v422 = vunpack.c.h.b16 %v257
        %v423 = vunpack.c.l.b16 %v258
        %v424 = vunpack.c.l.b16 %v259
        %v425 = vunpack.c.h.b16 %v259
        %v426 = vunpack.c.l.b16 %v260
        %v427 = vunpack.c.l.b16 %v261
        %v428 = vunpack.c.h.b16 %v261
        %v429 = vunpack.c.l.b16 %v262
        %v430 = vpack.c.b16 %v337, %v334
        %v431 = vpack.c.b16 %v338, %v335
        %v432 = vpack.c.b16 %v339, %v336
        %v433 = vpack.c.b16 %v343, %v340
        %v434 = vpack.c.b16 %v344, %v341
        %v435 = vpack.c.b16 %v345, %v342
        %v436 = vpack.c.b16 %v349, %v346
        %v437 = vpack.c.b16 %v350, %v347
        %v438 = vpack.c.b16 %v351, %v348
        %v439 = vpack.c.b16 %v355, %v352
        %v440 = vpack.c.b16 %v356, %v353
        %v441 = vpack.c.b16 %v357, %v354
        %v442 = vpack.c.b16 %v361, %v358
        %v443 = vpack.c.b16 %v362, %v359
        %v444 = vpack.c.b16 %v363, %v360
        %v445 = vpack.c.b16 %v367, %v364
        %v446 = vpack.c.b16 %v368, %v365
        %v447 = vpack.c.b16 %v369, %v366
        %v448 = vpack.c.b16 %v373, %v370
        %v449 = vpack.c.b16 %v374, %v371
        %v450 = vpack.c.b16 %v375, %v372
        %v451 = vpack.c.b16 %v379, %v376
        %v452 = vpack.c.b16 %v380, %v377
        %v453 = vpack.c.b16 %v381, %v378
        %v454 = vpack.c.b16 %v385, %v382
        %v455 = vpack.c.b16 %v386, %v383
        %v456 = vpack.c.b16 %v387, %v384
        %v457 = vpack.c.b16 %v391, %v388
        %v458 = vpack.c.b16 %v392, %v389
        %v459 = vpack.c.b16 %v393, %v390
        %v460 = vpack.c.b16 %v397, %v394
        %v461 = vpack.c.b16 %v398, %v395
        %v462 = vpack.c.b16 %v399, %v396
        %v463 = vpack.c.b16 %v403, %v400
        %v464 = vpack.c.b16 %v404, %v401
        %v465 = vpack.c.b16 %v405, %v402
        %v466 = vpack.c.b16 %v409, %v406
        %v467 = vpack.c.b16 %v410, %v407
        %v468 = vpack.c.b16 %v411, %v408
        %v469 = vpack.c.b16 %v415, %v412
        %v470 = vpack.c.b16 %v416, %v413
        %v471 = vpack.c.b16 %v417, %v414
        %v472 = vpack.c.b16 %v421, %v418
        %v473 = vpack.c.b16 %v422, %v419
        %v474 = vpack.c.b16 %v423, %v420
        %v475 = vpack.c.b16 %v427, %v424
        %v476 = vpack.c.b16 %v428, %v425
        %v477 = vpack.c.b16 %v429, %v426
        %526 = vmatprep.subr.bf16.mxu0 %v431
        %527 = vmatpush1.bf16.msra.mxu0 %v430
        %528 = vmatprep.subr.bf16.mxu0 %v434
        %529 = vmatpush1.bf16.msra.mxu0 %v433
        %530 = vmatprep.subr.bf16.mxu0 %v437
        %531 = vmatpush1.bf16.msra.mxu0 %v436
        %532 = vmatprep.subr.bf16.mxu0 %v440
        %533 = vmatpush1.bf16.msra.mxu0 %v439
        %534 = vmatprep.subr.bf16.mxu0 %v443
        %535 = vmatpush1.bf16.msra.mxu0 %v442
        %536 = vmatprep.subr.bf16.mxu0 %v446
        %537 = vmatpush1.bf16.msra.mxu0 %v445
        %538 = vmatprep.subr.bf16.mxu0 %v449
        %539 = vmatpush1.bf16.msra.mxu0 %v448
        %540 = vmatprep.subr.bf16.mxu0 %v452
        %541 = vmatpush1.bf16.msra.mxu0 %v451
        %542 = vmatprep.subr.bf16.mxu0 %v455
        %543 = vmatpush1.bf16.msra.mxu0 %v454
        %544 = vmatprep.subr.bf16.mxu0 %v458
        %545 = vmatpush1.bf16.msra.mxu0 %v457
        %546 = vmatprep.subr.bf16.mxu0 %v461
        %547 = vmatpush1.bf16.msra.mxu0 %v460
        %548 = vmatprep.subr.bf16.mxu0 %v464
        %549 = vmatpush1.bf16.msra.mxu0 %v463
        %550 = vmatprep.subr.bf16.mxu0 %v467
        %551 = vmatpush1.bf16.msra.mxu0 %v466
        %552 = vmatprep.subr.bf16.mxu0 %v470
        %553 = vmatpush1.bf16.msra.mxu0 %v469
        %554 = vmatprep.subr.bf16.mxu0 %v473
        %555 = vmatpush1.bf16.msra.mxu0 %v472
        %556 = vmatprep.subr.bf16.mxu0 %v476
        %557 = vmatpush1.bf16.msra.mxu0 %v475
        %558 = vmatprep.mubr.bf16.mxu0 %v267
        %559 = vmatmul.mubr.bf16.gmra.mrb[0].mxu0 %v266
        %v560 = vpop.f32.mrb[0].mxu0
        %v561 = vadd.f32 0.0, %v560
        %v562 = vpop.f32.mrb[0].mxu0
        %v563 = vadd.f32 0.0, %v562
        %v564 = vpop.f32.mrb[0].mxu0
        %v565 = vpop.f32.mrb[0].mxu0
        %566 = vdwg.mxu0
        %567 = vmatprep.subr.bf16.mxu0 0
        %568 = vmatpush1.bf16.msra.mxu0 %v432
        %569 = vmatprep.subr.bf16.mxu0 0
        %570 = vmatpush1.bf16.msra.mxu0 %v435
        %571 = vmatprep.subr.bf16.mxu0 0
        %572 = vmatpush1.bf16.msra.mxu0 %v438
        %573 = vmatprep.subr.bf16.mxu0 0
        %574 = vmatpush1.bf16.msra.mxu0 %v441
        %575 = vmatprep.subr.bf16.mxu0 0
        %576 = vmatpush1.bf16.msra.mxu0 %v444
        %577 = vmatprep.subr.bf16.mxu0 0
        %578 = vmatpush1.bf16.msra.mxu0 %v447
        %579 = vmatprep.subr.bf16.mxu0 0
        %580 = vmatpush1.bf16.msra.mxu0 %v450
        %581 = vmatprep.subr.bf16.mxu0 0
        %582 = vmatpush1.bf16.msra.mxu0 %v453
        %583 = vmatprep.subr.bf16.mxu0 0
        %584 = vmatpush1.bf16.msra.mxu0 %v456
        %585 = vmatprep.subr.bf16.mxu0 0
        %586 = vmatpush1.bf16.msra.mxu0 %v459
        %587 = vmatprep.subr.bf16.mxu0 0
        %588 = vmatpush1.bf16.msra.mxu0 %v462
        %589 = vmatprep.subr.bf16.mxu0 0
        %590 = vmatpush1.bf16.msra.mxu0 %v465
        %591 = vmatprep.subr.bf16.mxu0 0
        %592 = vmatpush1.bf16.msra.mxu0 %v468
        %593 = vmatprep.subr.bf16.mxu0 0
        %594 = vmatpush1.bf16.msra.mxu0 %v471
        %595 = vmatprep.subr.bf16.mxu0 0
        %596 = vmatpush1.bf16.msra.mxu0 %v474
        %597 = vmatprep.subr.bf16.mxu0 0
        %598 = vmatpush1.bf16.msra.mxu0 %v477
        %599 = vmatprep.mubr.bf16.mxu0 %v267
        %600 = vmatmul.mubr.bf16.gmra.mrb[0].mxu0 %v266
        %v601 = vpop.f32.mrb[0].mxu0
        %v602 = vadd.f32 0.0, %v601
        %v603 = vpop.f32.mrb[0].mxu0
        %v604 = vpop.f32.mrb[0].mxu0
        %v605 = vpop.f32.mrb[0].mxu0
        %606 = vdwg.mxu0
        %s607 = smul.u32 %s25, 128
        %s608 = sshra.s32 %s607, 7
        %s609 = sand.u32 %s607, 127
        %s610 = smul.addr %s608, 4
        %s611 = scalar_lea.vmem [#allocation2], %s610
        %v612 = vld [vmem:[%s611] sm:$0xf]
        %v613 = vunpack.c.l.bf16 %v612
        %v614 = vmul.f32 %v561, %v613
        %v615 = vmul.f32 %v614, 0.31830987
        %v616 = vand.u32 2147483647, %v615
        %vm617 = vcmp.le.f32.partialorder %v616, 0.7853982
        %vm618 = vcmp.lt.s32.totalorder %v615, 0
        %v619 = vand.u32 %v615, 2139095040
        %v620 = vshrl.u32 %v619, 23
        %v621 = vsub.s32 %v620, 127
        %v622 = vand.u32 2147483647, %v615
        %v623 = vand.u32 %v622, 8388607
        %v624 = vor.u32 %v623, 8388608
        %v625 = vsub.s32 0, %v624
        %v626 = vadd.s32 %v621, 1
        %vm627 = vcmp.gt.s32.totalorder %v626, 0
        %v628 = vsel %vm627, %v626, 0
        %v629 = vshrl.u32 %v628, 5
        %v630 = vand.u32 %v628, 31
        %v631 = vsub.s32 32, %v630
        %v632 = vshrl.u32 683565275, %v631
        %v633 = vshll.u32 683565275, %v630
        %v634 = vshrl.u32 2475754826, %v631
        %v635 = vor.u32 %v633, %v634
        %v636 = vshll.u32 2475754826, %v630
        %v637 = vshrl.u32 2131351028, %v631
        %v638 = vor.u32 %v636, %v637
        %v639 = vshll.u32 2131351028, %v630
        %v640 = vshrl.u32 2102212464, %v631
        %v641 = vor.u32 %v639, %v640
        %v642 = vshll.u32 2102212464, %v630
        %v643 = vshrl.u32 920167782, %v631
        %v644 = vor.u32 %v642, %v643
        %v645 = vshll.u32 920167782, %v630
        %v646 = vshrl.u32 1326507024, %v631
        %v647 = vor.u32 %v645, %v646
        %vm648 = vcmp.lt.s32.totalorder %v629, 1
        %vm649 = vcmp.lt.s32.totalorder %v629, 2
        %vm650 = vcmp.lt.s32.totalorder %v629, 3
        %vm651 = vcmp.lt.s32.totalorder %v629, 4
        %v652 = vsel %vm648, %v632, %v635
        %v653 = vsel %vm651, %v641, 2102212464
        %v654 = vsel %vm650, %v638, %v653
        %v655 = vsel %vm649, %v652, %v654
        %v656 = vsel %vm648, %v635, %v638
        %v657 = vsel %vm651, %v644, 920167782
        %v658 = vsel %vm650, %v641, %v657
        %v659 = vsel %vm649, %v656, %v658
        %v660 = vsel %vm648, %v638, %v641
        %v661 = vsel %vm651, %v647, 1326507024
        %v662 = vsel %vm650, %v644, %v661
        %v663 = vsel %vm649, %v660, %v662
        %v664 = vshll.u32 %v624, 8
        %v665 = vmul.u32.u64.compose %v664, %v663
        %v666 = vextract.low.u32 %v665
        %v667 = vextract.high.u32 %v665
        %v668 = vmul.u32.u64.compose %v664, %v659
        %v669 = vextract.low.u32 %v668
        %v670 = vextract.high.u32 %v668
        %v671 = vmul.u32 %v664, %v655
        %v672 = vadd.s32 %v667, %v669
        %vm673 = vc.u32 %v667, %v669
        %v674 = vadd.s32 %v670, 1
        %v675 = vsel %vm673, %v674, %v670
        %v676 = vadd.s32 %v671, %v675
        %v677 = vadd.s32 %v676, 536870912
        %v678 = vshrl.u32 %v677, 30
        %v679 = vshll.u32 %v678, 30
        %v680 = vsub.s32 %v676, %v679
        %vm681 = vcmp.lt.s32.totalorder %v680, 0
        %v682 = vsub.s32 0, %v680
        %v683 = vsel %vm681, %v682, %v680
        %v684 = vclz %v683
        %v685 = vsub.s32 %v684, 2
        %vm686 = vcmp.gt.s32.totalorder 0, %v685
        %v687 = vsel %vm686, 0, %v685
        %v688 = vsub.s32 32, %v687
        %v689 = vshll.u32 %v680, %v687
        %v690 = vshrl.u32 %v672, %v688
        %v691 = vor.u32 %v689, %v690
        %v692 = vsub.s32 4294967266, %v687
        %v693 = vadd.s32 %v692, 127
        %v694 = vshll.u32 %v693, 23
        %v695 = vor.u32 4788187, %v694
        %v696 = vand.u32 2147483647, %v695
        %v698 = vcvt.s32.f32 %v691
        %v699 = vmul.f32 %v698, %v696
        %v700 = vxor.u32 %v699, 2147483648
        %v701 = vsel %vm618, %v700, %v699
        %v702 = vsub.s32 4, %v678
        %v703 = vsel %vm618, %v702, %v678
        %v704 = vsel %vm617, %v615, %v701
        %v705 = vsel %vm617, 0, %v703
        %v706 = vcosq.f32.pop %v704
        %v707 = vsinq.f32.pop %v704
        %vm708 = vweird.f32 %v615
        %v709 = vadd.s32 %v705, 3
        %v710 = vand.u32 %v709, 3
        %vm711 = vcmp.lt.s32.totalorder %v710, 2
        %vm712 = vcmp.eq.s32.totalorder %v710, 0
        %v713 = vxor.u32 %v707, 2147483648
        %v714 = vsel %vm712, %v706, %v713
        %vm715 = vcmp.eq.s32.totalorder %v710, 2
        %v716 = vxor.u32 %v706, 2147483648
        %v717 = vsel %vm715, %v716, %v707
        %v718 = vsel %vm711, %v714, %v717
        %v719 = vsel %vm708, nan, %v718
        %v720 = vmul.f32 %v563, %v613
        %v721 = vand.u32 2147483647, %v720
        %vm722 = vcmp.le.f32.partialorder %v721, 0.7853982
        %vm723 = vcmp.lt.s32.totalorder %v720, 0
        %v724 = vand.u32 %v720, 2139095040
        %v725 = vshrl.u32 %v724, 23
        %v726 = vsub.s32 %v725, 127
        %v727 = vand.u32 2147483647, %v720
        %v728 = vand.u32 %v727, 8388607
        %v729 = vor.u32 %v728, 8388608
        %v730 = vsub.s32 0, %v729
        %v731 = vadd.s32 %v726, 1
        %vm732 = vcmp.gt.s32.totalorder %v731, 0
        %v733 = vsel %vm732, %v731, 0
        %v734 = vshrl.u32 %v733, 5
        %v735 = vand.u32 %v733, 31
        %v736 = vsub.s32 32, %v735
        %v737 = vshrl.u32 683565275, %v736
        %v738 = vshll.u32 683565275, %v735
        %v739 = vshrl.u32 2475754826, %v736
        %v740 = vor.u32 %v738, %v739
        %v741 = vshll.u32 2475754826, %v735
        %v742 = vshrl.u32 2131351028, %v736
        %v743 = vor.u32 %v741, %v742
        %v744 = vshll.u32 2131351028, %v735
        %v745 = vshrl.u32 2102212464, %v736
        %v746 = vor.u32 %v744, %v745
        %v747 = vshll.u32 2102212464, %v735
        %v748 = vshrl.u32 920167782, %v736
        %v749 = vor.u32 %v747, %v748
        %v750 = vshll.u32 920167782, %v735
        %v751 = vshrl.u32 1326507024, %v736
        %v752 = vor.u32 %v750, %v751
        %vm753 = vcmp.lt.s32.totalorder %v734, 1
        %vm754 = vcmp.lt.s32.totalorder %v734, 2
        %vm755 = vcmp.lt.s32.totalorder %v734, 3
        %vm756 = vcmp.lt.s32.totalorder %v734, 4
        %v757 = vsel %vm753, %v737, %v740
        %v758 = vsel %vm756, %v746, 2102212464
        %v759 = vsel %vm755, %v743, %v758
        %v760 = vsel %vm754, %v757, %v759
        %v761 = vsel %vm753, %v740, %v743
        %v762 = vsel %vm756, %v749, 920167782
        %v763 = vsel %vm755, %v746, %v762
        %v764 = vsel %vm754, %v761, %v763
        %v765 = vsel %vm753, %v743, %v746
        %v766 = vsel %vm756, %v752, 1326507024
        %v767 = vsel %vm755, %v749, %v766
        %v768 = vsel %vm754, %v765, %v767
        %v769 = vshll.u32 %v729, 8
        %v770 = vmul.u32.u64.compose %v769, %v768
        %v771 = vextract.low.u32 %v770
        %v772 = vextract.high.u32 %v770
        %v773 = vmul.u32.u64.compose %v769, %v764
        %v774 = vextract.low.u32 %v773
        %v775 = vextract.high.u32 %v773
        %v776 = vmul.u32 %v769, %v760
        %v777 = vadd.s32 %v772, %v774
        %vm778 = vc.u32 %v772, %v774
        %v779 = vadd.s32 %v775, 1
        %v780 = vsel %vm778, %v779, %v775
        %v781 = vadd.s32 %v776, %v780
        %v782 = vadd.s32 %v781, 536870912
        %v783 = vshrl.u32 %v782, 30
        %v784 = vshll.u32 %v783, 30
        %v785 = vsub.s32 %v781, %v784
        %vm786 = vcmp.lt.s32.totalorder %v785, 0
        %v787 = vsub.s32 0, %v785
        %v788 = vsel %vm786, %v787, %v785
        %v789 = vclz %v788
        %v790 = vsub.s32 %v789, 2
        %vm791 = vcmp.gt.s32.totalorder 0, %v790
        %v792 = vsel %vm791, 0, %v790
        %v793 = vsub.s32 32, %v792
        %v794 = vshll.u32 %v785, %v792
        %v795 = vshrl.u32 %v777, %v793
        %v796 = vor.u32 %v794, %v795
        %v797 = vsub.s32 4294967266, %v792
        %v798 = vadd.s32 %v797, 127
        %v799 = vshll.u32 %v798, 23
        %v800 = vor.u32 4788187, %v799
        %v801 = vand.u32 2147483647, %v800
        %v803 = vcvt.s32.f32 %v796
        %v804 = vmul.f32 %v803, %v801
        %v805 = vxor.u32 %v804, 2147483648
        %v806 = vsel %vm723, %v805, %v804
        %v807 = vsub.s32 4, %v783
        %v808 = vsel %vm723, %v807, %v783
        %v809 = vsel %vm722, %v720, %v806
        %v810 = vsel %vm722, 0, %v808
        %v811 = vcosq.f32.pop %v809
        %v812 = vsinq.f32.pop %v809
        %vm813 = vweird.f32 %v720
        %v814 = vadd.s32 %v810, 3
        %v815 = vand.u32 %v814, 3
        %vm816 = vcmp.lt.s32.totalorder %v815, 2
        %vm817 = vcmp.eq.s32.totalorder %v815, 0
        %v818 = vxor.u32 %v812, 2147483648
        %v819 = vsel %vm817, %v811, %v818
        %vm820 = vcmp.eq.s32.totalorder %v815, 2
        %v821 = vxor.u32 %v811, 2147483648
        %v822 = vsel %vm820, %v821, %v812
        %v823 = vsel %vm816, %v819, %v822
        %v824 = vsel %vm813, nan, %v823
        %v825 = vmul.f32 %v602, %v613
        %v826 = vmul.f32 %v825, 0.31830987
        %v827 = vadd.f32 %v719, %v824
        %v828 = vadd.f32 %v827, %v826
        %v829 = vmul.f32 %v613, %v828
        %830 = vst [vmem:[%s196] sm:$0xff] %v829
        %s831 = sand.u32 %s94, 1
        %s832 = scalar_lea.sflag [#allocation4], %s831
        %s833 = sand.u32 %s94, 1
        %s834 = smul.addr %s833, 8
        %s835 = scalar_lea.vmem [#allocation7], %s834
        // Predicated region
        $region37: #{tpu_custom_call.1} parent=27 // pred_check
          %p836 = pneg %p104
        $region38: #{tpu_custom_call.1} parent=27 // pred_check_branch
          %838 = sbr.rel (%p836) target = $region40
        $region39: #{tpu_custom_call.1} parent=27 // pred_region
          %s840 = ssub.s32 128, 128
          %841 = vsyncadd %s832, %s840
          %s842 = smul.addr %s24, 2
          %s843 = sadd.s32 %s25, %s842
          %s844 = smul.addr %s843, 128
          %s845 = scalar_lea.hbm %s2, %s844
          %s847 = sshll.u32 %s835, 4
          %s848 = int_to_ptr.vmem [resolvable:$true] %s847
          %850 = dma.vmem_to_hbm [thread:$0]  %s848, 128, %s845, %s832
        $region40: #{tpu_custom_call.1} parent=27 // pred_fallthru
          _
      $region28: #{tpu_custom_call.1} parent=5 // pred_fallthru
        _
      %p851 = scmp.le.s32.totalorder 2, %s15
      // Predicated region
      $region41: #{tpu_custom_call.1} parent=5 // pred_check
        %p852 = pneg %p851
      $region42: #{tpu_custom_call.1} parent=5 // pred_check_branch
        %854 = sbr.rel (%p852) target = $region44
      $region43: #{tpu_custom_call.1} parent=5 // pred_region
        %s855 = ssub.s32 %s15, 2
        // Predicated region
        $region45: #{tpu_custom_call.1} parent=43 // pred_check
          %p856 = pneg %p110
        $region46: #{tpu_custom_call.1} parent=43 // pred_check_branch
          %858 = sbr.rel (%p856) target = $region48
        $region47: #{tpu_custom_call.1} parent=43 // pred_region
          %s859 = sand.u32 %s95, 1
          %s860 = scalar_lea.sflag [#allocation4], %s859
          %s861 = sand.u32 %s95, 1
          %s862 = smul.addr %s861, 8
          %s863 = scalar_lea.vmem [#allocation7], %s862
          %864 = dma.done %s860, 128
        $region48: #{tpu_custom_call.1} parent=43 // pred_fallthru
          _
      $region44: #{tpu_custom_call.1} parent=5 // pred_fallthru
        _
    $region6: #{tpu_custom_call.1} parent=1 // loop_footer
      %s19 = sadd.s32 1, %s15
    $region7: #{tpu_custom_call.1} parent=1 // loop_footer_branch
      %14 = sbr.rel target = $region3
    $region8: #{tpu_custom_call.1} parent=1 // loop_exit
      _
    %865 = vsyncpa [#allocation3], 1
    %s866 = scalar_lea.sflag [#allocation3], 1
    %867 = vsyncpa %s866, 1
    %868 = vsyncpa [#allocation6], 1
    %s869 = scalar_lea.sflag [#allocation6], 1
    %870 = vsyncpa %s869, 1
    %871 = vsyncpa [#allocation4], 1
    %s872 = scalar_lea.sflag [#allocation4], 1
    %873 = vsyncpa %s872, 1

</llo_original>
